<compile_context>
chip_gen: v6e
topology: v6e:2x2x1
jax: 0.10.0
libtpu: 0.0.40
codegen_flags: <defaults>
</compile_context>

<pallas_src>
import jax
import jax.numpy as jnp
from jax.experimental import pallas as pl
from jax.experimental.pallas import tpu as pltpu


def _round_up(x, m):
    return ((x + m - 1) // m) * m


def _choose_tiles(M, D, H, V, budget_bytes=48 << 20):
    """Pick (tm, tv) so the double-buffered VMEM resident set fits ~48 MiB."""
    # Fixed residents: whole W_enc (double-buffered, bf16) + biases.
    fixed = 2 * D * H * 2 + 4 * H * 4
    avail = max(budget_bytes - fixed, 8 << 20)

    def var_usage(tm, tv):
        return (2 * tm * D * 2 + 2 * tm * 4          # x / label tiles (x2 buffers)
                + 2 * H * tv * 2 + 2 * tv * 4        # W_dec (bf16) / b_dec tiles
                + tm * H * 2 + 5 * tm * 4)           # enc scratch + LSE state + out

    tm = min(1024, _round_up(M, 16))
    tv_cands = [c for c in (2048, 1024, 512, 256, 128)
                if c <= max(_round_up(V, 128), 128)]
    tv = tv_cands[-1]
    for cand in tv_cands:
        tv = cand
        if var_usage(tm, tv) <= avail:
            break
    while tm > 128 and var_usage(tm, tv) > avail:
        tm //= 2
    return tm, tv


def encdec_loss_kernel(x_ref, lab_ref, wenc_ref, benc_ref, wdec_ref, bdec_ref,
                       ce_ref, enc_sc, m_sc, l_sc, pick_sc):
    # grid = (M tiles [parallel], V tiles [arbitrary / reduction])
    j = pl.program_id(1)
    nj = pl.num_programs(1)

    # --- first V tile: run the encoder once for this M tile, init LSE state ---
    @pl.when(j == 0)
    def _():
        enc_f32 = jnp.tanh(
            jnp.dot(x_ref[...], wenc_ref[...],                 # bf16 x bf16 -> f32
                    preferred_element_type=jnp.float32)
            + benc_ref[...]
        )                                                      # [TM, H] f32
        enc_sc[...] = enc_f32.astype(jnp.bfloat16)             # cache bf16 MXU operand
        m_sc[...] = jnp.full(m_sc.shape, -jnp.inf, dtype=jnp.float32)
        l_sc[...] = jnp.zeros(l_sc.shape, dtype=jnp.float32)
        pick_sc[...] = jnp.zeros(pick_sc.shape, dtype=jnp.float32)

    # --- decoder logits for this V tile (bf16 MXU, f32 accumulation) ---
    logits = (
        jnp.dot(enc_sc[...], wdec_ref[...],
                preferred_element_type=jnp.float32)
        + bdec_ref[...]
    )                                                          # [TM, TV] f32

    # --- online log-sum-exp across V tiles (all f32) ---
    m_new = jnp.maximum(m_sc[...], jnp.max(logits, axis=-1, keepdims=True))
    alpha = jnp.exp(m_sc[...] - m_new)
    l_sc[...] = alpha * l_sc[...] + jnp.sum(jnp.exp(logits - m_new),
                                            axis=-1, keepdims=True)
    m_sc[...] = m_new

    # --- pick the logit at the label column (exactly one V tile contributes) ---
    tv = logits.shape[-1]
    col = jax.lax.broadcasted_iota(jnp.int32, logits.shape, 1) + j * tv
    hit = col == lab_ref[...]                                  # [TM, TV] bool
    pick_sc[...] = pick_sc[...] + jnp.sum(
        jnp.where(hit, logits, 0.0), axis=-1, keepdims=True)

    # --- last V tile: finalize per-token cross-entropy (cold store) ---
    @pl.when(j == nj - 1)
    def _():
        ce_ref[...] = m_sc[...] + jnp.log(l_sc[...]) - pick_sc[...]   # [TM, 1]


def encdec_forward(x, labels, w_enc, b_enc, w_dec, b_dec, *, tm=None, tv=None):
    B, S, D = x.shape
    H = w_enc.shape[1]
    V = w_dec.shape[1]
    M = B * S

    tm_auto, tv_auto = _choose_tiles(M, D, H, V)
    tm = tm_auto if tm is None else tm
    tv = tv_auto if tv is None else tv

    # Fold batch + sequence into the matmul M dimension; bf16 MXU operands.
    x2 = x.reshape(M, D).astype(jnp.bfloat16)
    lab2 = labels.reshape(M, 1).astype(jnp.int32)

    m_pad = _round_up(M, tm)
    if m_pad != M:
        x2 = jnp.pad(x2, ((0, m_pad - M), (0, 0)))
        lab2 = jnp.pad(lab2, ((0, m_pad - M), (0, 0)))   # padded rows sliced off below

    # Pad V to a tv multiple: zero W_dec columns + -1e30 bias => exp underflows
    # to 0 and the online LSE is unchanged; labels never hit padded columns.
    v_pad = _round_up(V, tv)
    w_dec_b = w_dec.astype(jnp.bfloat16)
    b_dec_f = b_dec.astype(jnp.float32).reshape(1, V)
    if v_pad != V:
        w_dec_b = jnp.pad(w_dec_b, ((0, 0), (0, v_pad - V)))
        b_dec_f = jnp.pad(b_dec_f, ((0, 0), (0, v_pad - V)), constant_values=-1e30)

    w_enc_b = w_enc.astype(jnp.bfloat16)
    b_enc_f = b_enc.astype(jnp.float32).reshape(1, H)

    num_m, num_v = m_pad // tm, v_pad // tv

    # VMEM budget estimate -> explicit scoped limit (clamped: 64 MiB is the
    # v7x physical ceiling; v5e/v6e have 128 MiB so 64 MiB is safe everywhere).
    vmem_est = (2 * tm * D * 2 + 2 * tm * 4
                + 2 * D * H * 2 + 2 * H * 4
                + 2 * H * tv * 2 + 2 * tv * 4
                + 2 * tm * 4
                + tm * H * 2 + 3 * tm * 4)
    vmem_limit = int(min(64 << 20, max(32 << 20, int(vmem_est * 1.5))))

    cost = pl.CostEstimate(
        flops=2 * m_pad * D * H + 2 * m_pad * H * v_pad,
        transcendentals=m_pad * (v_pad + H),
        bytes_accessed=(m_pad * D * 2 + m_pad * 4 + m_pad * 4
                        + num_m * (D * H * 2 + H * v_pad * 2 + v_pad * 4)),
    )

    ce = pl.pallas_call(
        encdec_loss_kernel,
        out_shape=jax.ShapeDtypeStruct((m_pad, 1), jnp.float32),
        grid_spec=pltpu.PrefetchScalarGridSpec(
            num_scalar_prefetch=0,
            grid=(num_m, num_v),
            in_specs=[
                pl.BlockSpec((tm, D), lambda i, j: (i, 0)),    # x rows, bf16
                pl.BlockSpec((tm, 1), lambda i, j: (i, 0)),    # int32 labels
                pl.BlockSpec((D, H), lambda i, j: (0, 0)),     # W_enc (whole), bf16
                pl.BlockSpec((1, H), lambda i, j: (0, 0)),     # b_enc, f32
                pl.BlockSpec((H, tv), lambda i, j: (0, j)),    # W_dec, V-tiled, bf16
                pl.BlockSpec((1, tv), lambda i, j: (0, j)),    # b_dec, V-tiled, f32
            ],
            out_specs=pl.BlockSpec((tm, 1), lambda i, j: (i, 0)),  # per-token CE
            scratch_shapes=[
                pltpu.VMEM((tm, H), jnp.bfloat16),   # cached encoder output (bf16)
                pltpu.VMEM((tm, 1), jnp.float32),    # running max
                pltpu.VMEM((tm, 1), jnp.float32),    # running sum-exp
                pltpu.VMEM((tm, 1), jnp.float32),    # picked (label) logit
            ],
        ),
        compiler_params=pltpu.CompilerParams(
            dimension_semantics=("parallel", "arbitrary"),   # M parallel, V reduced
            vmem_limit_bytes=vmem_limit,
        ),
        cost_estimate=cost,
    )(x2, lab2, w_enc_b, b_enc_f, w_dec_b, b_dec_f)

    # torch.mean(torch.stack(losses)): per-example token-mean, then batch mean.
    ce_tok = ce[:M, 0].reshape(B, S)
    return jnp.mean(jnp.mean(ce_tok, axis=-1))


def reference_forward(x, labels, w_enc, b_enc, w_dec, b_dec,
                      mxu_dtype=jnp.float32):
    """Pure-JAX reference; mxu_dtype=bfloat16 mirrors the kernel's MXU casts."""
    xm = x.astype(mxu_dtype)
    wem = w_enc.astype(mxu_dtype)
    wdm = w_dec.astype(mxu_dtype)
    enc = jnp.tanh(jnp.einsum("bsd,dh->bsh", xm, wem,
                              preferred_element_type=jnp.float32) + b_enc)
    logits = jnp.einsum("bsh,hv->bsv", enc.astype(mxu_dtype), wdm,
                        preferred_element_type=jnp.float32) + b_dec
    logp = jax.nn.log_softmax(logits, axis=-1)
    ce = -jnp.take_along_axis(logp, labels[..., None], axis=-1)[..., 0]   # [B, S]
    return jnp.mean(jnp.mean(ce, axis=-1))


if __name__ == "__main__":
    # small shapes consistent with an enc-dec loss forward
    B, S, D_in, H, V = 2, 8, 32, 32, 128

    key = jax.random.PRNGKey(0)
    kx, kt, kwe, kbe, kwd, kbd = jax.random.split(key, 6)

    x = jax.random.normal(kx, (B, S, D_in), dtype=jnp.float32)
    labels = jax.random.randint(kt, (B, S), 0, V)

    # deterministic synthetic parameters (no checkpoint loading)
    w_enc = 0.1 * jax.random.normal(kwe, (D_in, H), dtype=jnp.float32)
    b_enc = 0.01 * jax.random.normal(kbe, (1, H), dtype=jnp.float32)
    w_dec = 0.1 * jax.random.normal(kwd, (H, V), dtype=jnp.float32)
    b_dec = 0.01 * jax.random.normal(kbd, (1, V), dtype=jnp.float32)

    loss = encdec_forward(x, labels, w_enc, b_enc, w_dec, b_dec)
    loss = jax.block_until_ready(loss)

    # Tight check vs mixed-precision reference (same bf16 MXU operands, f32 math)
    ref_mixed = reference_forward(x, labels, w_enc, b_enc, w_dec, b_dec,
                                  mxu_dtype=jnp.bfloat16)
    assert jnp.allclose(loss, ref_mixed, rtol=1e-3, atol=1e-3), (loss, ref_mixed)
    # Looser sanity check vs the full-f32 module semantics
    ref_f32 = reference_forward(x, labels, w_enc, b_enc, w_dec, b_dec)
    assert jnp.allclose(loss, ref_f32, rtol=2e-2, atol=2e-2), (loss, ref_f32)

    # TODO(synk): the data-loading / preproc machinery (ZippedDataset, registry,
    # raw-item serialization) has no TPU-kernel equivalent and is omitted.
    print("KERNEL_OK")
</pallas_src>

<mosaic_0001>
module attributes {stable_mosaic.version = 11 : i64} {
  func.func @encdec_loss_kernel(%arg0: i32, %arg1: i32, %arg2: memref<16x32xbf16, #tpu.memory_space<vmem>>, %arg3: memref<16x1xi32, #tpu.memory_space<vmem>>, %arg4: memref<32x32xbf16, #tpu.memory_space<vmem>>, %arg5: memref<1x32xf32, #tpu.memory_space<vmem>>, %arg6: memref<32x128xbf16, #tpu.memory_space<vmem>>, %arg7: memref<1x128xf32, #tpu.memory_space<vmem>>, %arg8: memref<16x1xf32, #tpu.memory_space<vmem>>, %arg9: memref<16x32xbf16, #tpu.memory_space<vmem>>, %arg10: memref<16x1xf32, #tpu.memory_space<vmem>>, %arg11: memref<16x1xf32, #tpu.memory_space<vmem>>, %arg12: memref<16x1xf32, #tpu.memory_space<vmem>>) attributes {dimension_semantics = [#tpu.dimension_semantics<parallel>, #tpu.dimension_semantics<arbitrary>], iteration_bounds = array<i64: 1, 1>, scalar_prefetch = 0 : i64, scratch_operands = 4 : i64, tpu.core_type = #tpu.core_type<tc>, window_params = [{transform_indices = @transform_0, window_bounds = array<i64: 16, 32>}, {transform_indices = @transform_1, window_bounds = array<i64: 16, 1>}, {pipeline_mode = #tpu.pipeline_mode<synchronous>, transform_indices = @transform_2, window_bounds = array<i64: 32, 32>}, {pipeline_mode = #tpu.pipeline_mode<synchronous>, transform_indices = @transform_3, window_bounds = array<i64: 1, 32>}, {transform_indices = @transform_4, window_bounds = array<i64: 32, 128>}, {transform_indices = @transform_5, window_bounds = array<i64: 1, 128>}, {transform_indices = @transform_6, window_bounds = array<i64: 16, 1>}]} {
    %c0_i32 = arith.constant 0 : i32
    %0 = arith.cmpi eq, %arg1, %c0_i32 : i32
    %1 = arith.extui %0 : i1 to i32
    %c0_i32_0 = arith.constant 0 : i32
    %2 = arith.cmpi ne, %1, %c0_i32_0 : i32
    scf.if %2 {
      %c0_28 = arith.constant 0 : index
      %c0_29 = arith.constant 0 : index
      %43 = vector.load %arg2[%c0_28, %c0_29] : memref<16x32xbf16, #tpu.memory_space<vmem>>, vector<16x32xbf16>
      %c0_30 = arith.constant 0 : index
      %c0_31 = arith.constant 0 : index
      %44 = vector.load %arg4[%c0_30, %c0_31] : memref<32x32xbf16, #tpu.memory_space<vmem>>, vector<32x32xbf16>
      %cst_32 = arith.constant dense<0.000000e+00> : vector<16x32xf32>
      %45 = tpu.matmul %43, %44, %cst_32 {dimension_numbers = #tpu.dot_dimension_numbers<[1], [0], [0], [1], [0, 0, 1, 1], [], []>} : vector<16x32xbf16>, vector<32x32xbf16>, vector<16x32xf32> -> vector<16x32xf32>
      %c0_33 = arith.constant 0 : index
      %c0_34 = arith.constant 0 : index
      %46 = vector.load %arg5[%c0_33, %c0_34] : memref<1x32xf32, #tpu.memory_space<vmem>>, vector<1x32xf32>
      %47 = vector.broadcast %46 : vector<1x32xf32> to vector<16x32xf32>
      %48 = arith.addf %45, %47 : vector<16x32xf32>
      %49 = math.tanh %48 : vector<16x32xf32>
      %50 = arith.truncf %49 : vector<16x32xf32> to vector<16x32xbf16>
      %c0_35 = arith.constant 0 : index
      %c0_36 = arith.constant 0 : index
      %51 = vector.load %arg9[%c0_35, %c0_36] : memref<16x32xbf16, #tpu.memory_space<vmem>>, vector<16x32xbf16>
      tpu.vector_store %arg9[%c0_35, %c0_36], %50 {strides = array<i32>} : memref<16x32xbf16, #tpu.memory_space<vmem>>, vector<16x32xbf16>,
      %cst_37 = arith.constant 0xFF800000 : f32
      %52 = vector.broadcast %cst_37 : f32 to vector<16x1xf32>
      %c0_38 = arith.constant 0 : index
      %c0_39 = arith.constant 0 : index
      %53 = vector.load %arg10[%c0_38, %c0_39] : memref<16x1xf32, #tpu.memory_space<vmem>>, vector<16x1xf32>
      tpu.vector_store %arg10[%c0_38, %c0_39], %52 {strides = array<i32>} : memref<16x1xf32, #tpu.memory_space<vmem>>, vector<16x1xf32>,
      %cst_40 = arith.constant 0.000000e+00 : f32
      %54 = vector.broadcast %cst_40 : f32 to vector<16x1xf32>
      %c0_41 = arith.constant 0 : index
      %c0_42 = arith.constant 0 : index
      %55 = vector.load %arg11[%c0_41, %c0_42] : memref<16x1xf32, #tpu.memory_space<vmem>>, vector<16x1xf32>
      tpu.vector_store %arg11[%c0_41, %c0_42], %54 {strides = array<i32>} : memref<16x1xf32, #tpu.memory_space<vmem>>, vector<16x1xf32>,
      %cst_43 = arith.constant 0.000000e+00 : f32
      %56 = vector.broadcast %cst_43 : f32 to vector<16x1xf32>
      %c0_44 = arith.constant 0 : index
      %c0_45 = arith.constant 0 : index
      %57 = vector.load %arg12[%c0_44, %c0_45] : memref<16x1xf32, #tpu.memory_space<vmem>>, vector<16x1xf32>
      tpu.vector_store %arg12[%c0_44, %c0_45], %56 {strides = array<i32>} : memref<16x1xf32, #tpu.memory_space<vmem>>, vector<16x1xf32>,
    } else {
    }
    %c0 = arith.constant 0 : index
    %c0_1 = arith.constant 0 : index
    %3 = vector.load %arg9[%c0, %c0_1] : memref<16x32xbf16, #tpu.memory_space<vmem>>, vector<16x32xbf16>
    %c0_2 = arith.constant 0 : index
    %c0_3 = arith.constant 0 : index
    %4 = vector.load %arg6[%c0_2, %c0_3] : memref<32x128xbf16, #tpu.memory_space<vmem>>, vector<32x128xbf16>
    %cst = arith.constant dense<0.000000e+00> : vector<16x128xf32>
    %5 = tpu.matmul %3, %4, %cst {dimension_numbers = #tpu.dot_dimension_numbers<[1], [0], [0], [1], [0, 0, 1, 1], [], []>} : vector<16x32xbf16>, vector<32x128xbf16>, vector<16x128xf32> -> vector<16x128xf32>
    %c0_4 = arith.constant 0 : index
    %c0_5 = arith.constant 0 : index
    %6 = vector.load %arg7[%c0_4, %c0_5] : memref<1x128xf32, #tpu.memory_space<vmem>>, vector<1x128xf32>
    %7 = vector.broadcast %6 : vector<1x128xf32> to vector<16x128xf32>
    %8 = arith.addf %5, %7 : vector<16x128xf32>
    %c0_6 = arith.constant 0 : index
    %c0_7 = arith.constant 0 : index
    %9 = vector.load %arg10[%c0_6, %c0_7] : memref<16x1xf32, #tpu.memory_space<vmem>>, vector<16x1xf32>
    %cst_8 = arith.constant dense<0xFF800000> : vector<16xf32>
    %10 = vector.multi_reduction <maximumf>, %8, %cst_8 [1] : vector<16x128xf32> to vector<16xf32>
    %11 = vector.shape_cast %10 : vector<16xf32> to vector<16x1xf32>
    %12 = arith.maximumf %9, %11 : vector<16x1xf32>
    %c0_9 = arith.constant 0 : index
    %c0_10 = arith.constant 0 : index
    %13 = vector.load %arg10[%c0_9, %c0_10] : memref<16x1xf32, #tpu.memory_space<vmem>>, vector<16x1xf32>
    %14 = arith.subf %13, %12 : vector<16x1xf32>
    %15 = math.exp %14 : vector<16x1xf32>
    %c0_11 = arith.constant 0 : index
    %c0_12 = arith.constant 0 : index
    %16 = vector.load %arg11[%c0_11, %c0_12] : memref<16x1xf32, #tpu.memory_space<vmem>>, vector<16x1xf32>
    %17 = arith.mulf %15, %16 : vector<16x1xf32>
    %18 = vector.broadcast %12 : vector<16x1xf32> to vector<16x128xf32>
    %19 = arith.subf %8, %18 : vector<16x128xf32>
    %20 = math.exp %19 : vector<16x128xf32>
    %cst_13 = arith.constant dense<0.000000e+00> : vector<16xf32>
    %21 = vector.multi_reduction <add>, %20, %cst_13 [1] : vector<16x128xf32> to vector<16xf32>
    %22 = vector.shape_cast %21 : vector<16xf32> to vector<16x1xf32>
    %23 = arith.addf %17, %22 : vector<16x1xf32>
    %c0_14 = arith.constant 0 : index
    %c0_15 = arith.constant 0 : index
    %24 = vector.load %arg11[%c0_14, %c0_15] : memref<16x1xf32, #tpu.memory_space<vmem>>, vector<16x1xf32>
    tpu.vector_store %arg11[%c0_14, %c0_15], %23 {strides = array<i32>} : memref<16x1xf32, #tpu.memory_space<vmem>>, vector<16x1xf32>,
    %c0_16 = arith.constant 0 : index
    %c0_17 = arith.constant 0 : index
    %25 = vector.load %arg10[%c0_16, %c0_17] : memref<16x1xf32, #tpu.memory_space<vmem>>, vector<16x1xf32>
    tpu.vector_store %arg10[%c0_16, %c0_17], %12 {strides = array<i32>} : memref<16x1xf32, #tpu.memory_space<vmem>>, vector<16x1xf32>,
    %26 = tpu.iota {dimensions = array<i32: 1>} : vector<16x128xi32>
    %c128_i32 = arith.constant 128 : i32
    %27 = arith.muli %arg1, %c128_i32 : i32
    %28 = vector.broadcast %27 : i32 to vector<16x128xi32>
    %29 = arith.addi %26, %28 : vector<16x128xi32>
    %c0_18 = arith.constant 0 : index
    %c0_19 = arith.constant 0 : index
    %30 = vector.load %arg3[%c0_18, %c0_19] : memref<16x1xi32, #tpu.memory_space<vmem>>, vector<16x1xi32>
    %31 = vector.broadcast %30 : vector<16x1xi32> to vector<16x128xi32>
    %32 = arith.cmpi eq, %29, %31 : vector<16x128xi32>
    %c0_20 = arith.constant 0 : index
    %c0_21 = arith.constant 0 : index
    %33 = vector.load %arg12[%c0_20, %c0_21] : memref<16x1xf32, #tpu.memory_space<vmem>>, vector<16x1xf32>
    %cst_22 = arith.constant 0.000000e+00 : f32
    %34 = vector.broadcast %cst_22 : f32 to vector<16x128xf32>
    %35 = arith.select %32, %8, %34 : vector<16x128xi1>, vector<16x128xf32>
    %cst_23 = arith.constant dense<0.000000e+00> : vector<16xf32>
    %36 = vector.multi_reduction <add>, %35, %cst_23 [1] : vector<16x128xf32> to vector<16xf32>
    %37 = vector.shape_cast %36 : vector<16xf32> to vector<16x1xf32>
    %38 = arith.addf %33, %37 : vector<16x1xf32>
    %c0_24 = arith.constant 0 : index
    %c0_25 = arith.constant 0 : index
    %39 = vector.load %arg12[%c0_24, %c0_25] : memref<16x1xf32, #tpu.memory_space<vmem>>, vector<16x1xf32>
    tpu.vector_store %arg12[%c0_24, %c0_25], %38 {strides = array<i32>} : memref<16x1xf32, #tpu.memory_space<vmem>>, vector<16x1xf32>,
    %c0_i32_26 = arith.constant 0 : i32
    %40 = arith.cmpi eq, %arg1, %c0_i32_26 : i32
    %41 = arith.extui %40 : i1 to i32
    %c0_i32_27 = arith.constant 0 : i32
    %42 = arith.cmpi ne, %41, %c0_i32_27 : i32
    scf.if %42 {
      %c0_28 = arith.constant 0 : index
      %c0_29 = arith.constant 0 : index
      %43 = vector.load %arg10[%c0_28, %c0_29] : memref<16x1xf32, #tpu.memory_space<vmem>>, vector<16x1xf32>
      %c0_30 = arith.constant 0 : index
      %c0_31 = arith.constant 0 : index
      %44 = vector.load %arg11[%c0_30, %c0_31] : memref<16x1xf32, #tpu.memory_space<vmem>>, vector<16x1xf32>
      %45 = math.log %44 : vector<16x1xf32>
      %46 = arith.addf %43, %45 : vector<16x1xf32>
      %c0_32 = arith.constant 0 : index
      %c0_33 = arith.constant 0 : index
      %47 = vector.load %arg12[%c0_32, %c0_33] : memref<16x1xf32, #tpu.memory_space<vmem>>, vector<16x1xf32>
      %48 = arith.subf %46, %47 : vector<16x1xf32>
      %c0_34 = arith.constant 0 : index
      %c0_35 = arith.constant 0 : index
      %49 = vector.load %arg8[%c0_34, %c0_35] : memref<16x1xf32, #tpu.memory_space<vmem>>, vector<16x1xf32>
      tpu.vector_store %arg8[%c0_34, %c0_35], %48 {strides = array<i32>} : memref<16x1xf32, #tpu.memory_space<vmem>>, vector<16x1xf32>,
    } else {
    }
    return
  }
  func.func @transform_0(%arg0: i32, %arg1: i32) -> (i32, i32) {
    %c0_i32 = arith.constant 0 : i32
    %c0_i32_0 = arith.constant 0 : i32
    return %arg0, %c0_i32 : i32, i32
  }
  func.func @transform_1(%arg0: i32, %arg1: i32) -> (i32, i32) {
    %c0_i32 = arith.constant 0 : i32
    %c0_i32_0 = arith.constant 0 : i32
    return %arg0, %c0_i32 : i32, i32
  }
  func.func @transform_2(%arg0: i32, %arg1: i32) -> (i32, i32) {
    %c0_i32 = arith.constant 0 : i32
    %c0_i32_0 = arith.constant 0 : i32
    %c0_i32_1 = arith.constant 0 : i32
    return %c0_i32, %c0_i32_0 : i32, i32
  }
  func.func @transform_3(%arg0: i32, %arg1: i32) -> (i32, i32) {
    %c0_i32 = arith.constant 0 : i32
    %c0_i32_0 = arith.constant 0 : i32
    %c0_i32_1 = arith.constant 0 : i32
    return %c0_i32, %c0_i32_0 : i32, i32
  }
  func.func @transform_4(%arg0: i32, %arg1: i32) -> (i32, i32) {
    %c0_i32 = arith.constant 0 : i32
    %c0_i32_0 = arith.constant 0 : i32
    return %c0_i32, %arg1 : i32, i32
  }
  func.func @transform_5(%arg0: i32, %arg1: i32) -> (i32, i32) {
    %c0_i32 = arith.constant 0 : i32
    %c0_i32_0 = arith.constant 0 : i32
    return %c0_i32, %arg1 : i32, i32
  }
  func.func @transform_6(%arg0: i32, %arg1: i32) -> (i32, i32) {
    %c0_i32 = arith.constant 0 : i32
    %c0_i32_0 = arith.constant 0 : i32
    return %arg0, %c0_i32 : i32, i32
  }
}

</mosaic_0001>

<llo_original>
// kernel: tpu_custom_call.1
$region0: #{tpu_custom_call.1}
  #allocation0 [shape = 'u32[]', space=smem, size = 0x4, offset = 0x4, fixed_abs, tag = 'smem constant byte address 0x4 - core index']
  #allocation1 [shape = 'u32[144,128]{1,0:T(1,128)}', space=vmem, size = 0x12000, scoped, tag = 'internal scratch']
  #allocation2 [shape = 'bf16[16,32]{1,0:T(8,128)(2,1)}', space=vmem, size = 0x1000, scoped, tag = 'scratch operand']
  #allocation3 [shape = 'f32[16,1]{1,0:T(8,128)}', space=vmem, size = 0x2000, scoped, tag = 'scratch operand']
  #allocation4 [shape = 'f32[16,1]{1,0:T(8,128)}', space=vmem, size = 0x2000, scoped, tag = 'scratch operand']
  #allocation5 [shape = 'f32[16,1]{1,0:T(8,128)}', space=vmem, size = 0x2000, scoped, tag = 'scratch operand']
  %s0 = inlined_call_operand.hbm [shape: bf16[16,32], index: 0, kind: input, shape index: {}]
  %s1 = inlined_call_operand.vmem [shape: s32[16,1], index: 1, kind: input, shape index: {}]
  %s2 = inlined_call_operand.vmem [shape: bf16[32,32], index: 2, kind: input, shape index: {}]
  %s3 = inlined_call_operand.vmem [shape: f32[1,32], index: 3, kind: input, shape index: {}]
  %s4 = inlined_call_operand.hbm [shape: bf16[32,128], index: 4, kind: input, shape index: {}]
  %s5 = inlined_call_operand.vmem [shape: f32[1,128], index: 5, kind: input, shape index: {}]
  %s6 = inlined_call_operand.vmem [shape: f32[16,1], index: 6, kind: output, shape index: {}]
  %s7 = sld [smem:[#allocation0]]
  $region50: #{tpu_custom_call.1} parent=0
    _
  %s9 = ssub.s32 1, %s7
  %s10 = scalar_select 0, %s9, %s7
  $region1: #{tpu_custom_call.1} parent=0
    #allocation6 [shape = 'u8[4096]{0}', space=vmem, size = 0x1000, scoped, tag = 'input window, operand 0, single buffered']
    #allocation7 [shape = 's32[1]{0}', space=sflag, size = 0x4, scoped, tag = 'scoped memory for tpu_custom_call.1']
    #allocation8 [shape = 'u8[8192]{0}', space=vmem, size = 0x2000, scoped, tag = 'input window, operand 4, single buffered']
    #allocation9 [shape = 's32[1]{0}', space=sflag, size = 0x4, scoped, tag = 'scoped memory for tpu_custom_call.1']
    %11 = vsyncpa [#allocation7], 0
    %12 = vsyncpa [#allocation9], 0
    // Predicated region
    $region2: #{tpu_custom_call.1} parent=1 // pred_check
      _
    $region3: #{tpu_custom_call.1} parent=1 // pred_check_branch
      %14 = sbr.rel (0) target = $region5
    $region4: #{tpu_custom_call.1} parent=1 // pred_region
      %s16 = ssub.s32 128, 128
      %17 = vsyncadd [#allocation7], %s16
      %s18 = sshll.u32 [#allocation6], 4
      %s19 = int_to_ptr.vmem [resolvable:$true] %s18
      %24 = dma.hbm_to_vmem [thread:$0]  %s0, 128, %s19, [#allocation7], 64, 64, 4
    $region5: #{tpu_custom_call.1} parent=1 // pred_fallthru
      _
    // Predicated region
    $region6: #{tpu_custom_call.1} parent=1 // pred_check
      _
    $region7: #{tpu_custom_call.1} parent=1 // pred_check_branch
      %26 = sbr.rel (0) target = $region9
    $region8: #{tpu_custom_call.1} parent=1 // pred_region
      _
    $region9: #{tpu_custom_call.1} parent=1 // pred_fallthru
      _
    // Predicated region
    $region10: #{tpu_custom_call.1} parent=1 // pred_check
      _
    $region11: #{tpu_custom_call.1} parent=1 // pred_check_branch
      %28 = sbr.rel (0) target = $region13
    $region12: #{tpu_custom_call.1} parent=1 // pred_region
      _
    $region13: #{tpu_custom_call.1} parent=1 // pred_fallthru
      _
    // Predicated region
    $region14: #{tpu_custom_call.1} parent=1 // pred_check
      _
    $region15: #{tpu_custom_call.1} parent=1 // pred_check_branch
      %30 = sbr.rel (0) target = $region17
    $region16: #{tpu_custom_call.1} parent=1 // pred_region
      _
    $region17: #{tpu_custom_call.1} parent=1 // pred_fallthru
      _
    // Predicated region
    $region18: #{tpu_custom_call.1} parent=1 // pred_check
      _
    $region19: #{tpu_custom_call.1} parent=1 // pred_check_branch
      %32 = sbr.rel (0) target = $region21
    $region20: #{tpu_custom_call.1} parent=1 // pred_region
      %s34 = ssub.s32 256, 256
      %35 = vsyncadd [#allocation9], %s34
      %s36 = sshll.u32 [#allocation8], 4
      %s37 = int_to_ptr.vmem [resolvable:$true] %s36
      %42 = dma.hbm_to_vmem [thread:$0]  %s4, 256, %s37, [#allocation9], 64, 64, 4
    $region21: #{tpu_custom_call.1} parent=1 // pred_fallthru
      _
    // Predicated region
    $region22: #{tpu_custom_call.1} parent=1 // pred_check
      _
    $region23: #{tpu_custom_call.1} parent=1 // pred_check_branch
      %44 = sbr.rel (0) target = $region25
    $region24: #{tpu_custom_call.1} parent=1 // pred_region
      _
    $region25: #{tpu_custom_call.1} parent=1 // pred_fallthru
      _
    // Predicated region
    $region26: #{tpu_custom_call.1} parent=1 // pred_check
      _
    $region27: #{tpu_custom_call.1} parent=1 // pred_check_branch
      %46 = sbr.rel (0) target = $region29
    $region28: #{tpu_custom_call.1} parent=1 // pred_region
      %47 = dma.done [#allocation7], 128
    $region29: #{tpu_custom_call.1} parent=1 // pred_fallthru
      _
    // Predicated region
    $region30: #{tpu_custom_call.1} parent=1 // pred_check
      _
    $region31: #{tpu_custom_call.1} parent=1 // pred_check_branch
      %49 = sbr.rel (0) target = $region33
    $region32: #{tpu_custom_call.1} parent=1 // pred_region
      %50 = dma.done [#allocation9], 256
    $region33: #{tpu_custom_call.1} parent=1 // pred_fallthru
      _
    %p52 = scmp.eq.s32.totalorder 0, 0
    // Predicated region
    $region34: #{tpu_custom_call.1} parent=1 // pred_check
      %p53 = pneg %p52
    $region35: #{tpu_custom_call.1} parent=1 // pred_check_branch
      %55 = sbr.rel (%p53) target = $region37
    $region36: #{tpu_custom_call.1} parent=1 // pred_region
      %v56 = vld [vmem:[#allocation6] sm:$0xf]
      %v57 = vld [vmem:[#allocation6 + $0x4] sm:$0xf]
      %v58 = vld [vmem:[%s2] sm:$0xf]
      %v59 = vld [vmem:[%s2 + $0x4] sm:$0xf]
      %v60 = vld [vmem:[%s2 + $0x8] sm:$0xf]
      %v61 = vld [vmem:[%s2 + $0xc] sm:$0xf]
      %v62 = vld [vmem:[%s3] sm:$0x1]
      %v64 = vlaneseq
      %v65 = vshrl.u32 %v64, 7
      %v66 = vsub.s32 0, %v65
      %v67 = vrot.slane %v62, %v66
      %v71 = vunpack.c.l.b16 %v56
      %v72 = vunpack.c.l.b16 %v57
      %v73 = vpack.c.b16 %v72, %v71
      %v78 = vunpack.c.l.b16 %v58
      %v79 = vunpack.c.l.b16 %v59
      %v80 = vunpack.c.l.b16 %v60
      %v81 = vunpack.c.l.b16 %v61
      %v82 = vpack.c.b16 %v79, %v78
      %v83 = vpack.c.b16 %v81, %v80
      %vm86 = vcmask 261120
      %v88 = vsel %vm86, %v73, 0
      %90 = vmatprep.subr.bf16.mxu0 0
      %91 = vmatpush1.bf16.msra.mxu0 0
      %92 = vmatprep.subr.bf16.mxu0 0
      %93 = vmatpush1.bf16.msra.mxu0 0
      %94 = vmatprep.subr.bf16.mxu0 0
      %95 = vmatpush1.bf16.msra.mxu0 0
      %96 = vmatprep.subr.bf16.mxu0 0
      %97 = vmatpush1.bf16.msra.mxu0 0
      %98 = vmatprep.subr.bf16.mxu0 0
      %99 = vmatpush1.bf16.msra.mxu0 0
      %100 = vmatprep.subr.bf16.mxu0 0
      %101 = vmatpush1.bf16.msra.mxu0 0
      %102 = vmatprep.subr.bf16.mxu0 0
      %103 = vmatpush1.bf16.msra.mxu0 %v83
      %104 = vmatprep.subr.bf16.mxu0 0
      %105 = vmatpush1.bf16.msra.mxu0 %v82
      %106 = vmatprep.subr.bf16.mxu0 0
      %107 = vmatpush2.bf16.msra.mxu0 0
      %108 = vmatprep.subr.bf16.mxu0 0
      %109 = vmatpush2.bf16.msra.mxu0 0
      %110 = vmatprep.subr.bf16.mxu0 0
      %111 = vmatpush2.bf16.msra.mxu0 0
      %112 = vmatprep.subr.bf16.mxu0 0
      %113 = vmatpush2.bf16.msra.mxu0 0
      %114 = vmatprep.subr.bf16.mxu0 0
      %115 = vmatpush2.bf16.msra.mxu0 0
      %116 = vmatprep.subr.bf16.mxu0 0
      %117 = vmatpush2.bf16.msra.mxu0 0
      %118 = vmatprep.subr.bf16.mxu0 0
      %119 = vmatpush2.bf16.msra.mxu0 0
      %120 = vmatprep.subr.bf16.mxu0 0
      %121 = vmatpush2.bf16.msra.mxu0 0
      %122 = vmatprep.mubr.bf16.mxu0 0
      %123 = vmatmul.mubr.bf16.gmra.mxu0 %v88
      %v124 = vpop.f32.mrf.mxu0
      %v125 = vadd.f32 %v67, %v124
      %v126 = vpop.f32.mrf.mxu0
      %v127 = vpop.f32.mrf.mxu0
      %v128 = vadd.f32 %v67, %v127
      %v129 = vpop.f32.mrf.mxu0
      %130 = vdwg.mxu0
      %v131 = vtanh.pop %v125
      %v132 = vtanh.pop %v128
      %v133 = vpack.c.bf16 %v132, %v131
      %v135 = vunpack.c.l.b16 %v133
      %v136 = vunpack.c.h.b16 %v133
      %v137 = vpack.c.b16 %v135, %v135
      %v138 = vpack.c.b16 %v136, %v136
      %vm141 = vcmask 257024
      %142 = vst.msk [vmem:[#allocation2] sm:$0xf] %vm141, %v137
      %143 = vst.msk [vmem:[#allocation2 + $0x4] sm:$0xf] %vm141, %v138
      %vm144 = vcmask 7168
      %145 = vst.msk [vmem:[#allocation3] sm:$0xff] %vm144, -inf
      %146 = vst.msk [vmem:[#allocation3 + $0x8] sm:$0xff] %vm144, -inf
      %147 = vst.msk [vmem:[#allocation4] sm:$0xff] %vm144, 0.0
      %148 = vst.msk [vmem:[#allocation4 + $0x8] sm:$0xff] %vm144, 0.0
      %149 = vst.msk [vmem:[#allocation5] sm:$0xff] %vm144, 0.0
      %150 = vst.msk [vmem:[#allocation5 + $0x8] sm:$0xff] %vm144, 0.0
    $region37: #{tpu_custom_call.1} parent=1 // pred_fallthru
      _
    %v151 = vld [vmem:[#allocation2] sm:$0xf]
    %v152 = vld [vmem:[#allocation2 + $0x4] sm:$0xf]
    %v153 = vld [vmem:[#allocation8] sm:$0xf]
    %v154 = vld [vmem:[#allocation8 + $0x4] sm:$0xf]
    %v155 = vld [vmem:[#allocation8 + $0x8] sm:$0xf]
    %v156 = vld [vmem:[#allocation8 + $0xc] sm:$0xf]
    %v157 = vld [vmem:[%s5] sm:$0x1]
    %v159 = vlaneseq
    %v160 = vshrl.u32 %v159, 7
    %v161 = vsub.s32 0, %v160
    %v162 = vrot.slane %v157, %v161
    %v166 = vunpack.c.l.b16 %v151
    %v167 = vunpack.c.l.b16 %v152
    %v168 = vpack.c.b16 %v167, %v166
    %v173 = vunpack.c.l.b16 %v153
    %v174 = vunpack.c.l.b16 %v154
    %v175 = vunpack.c.l.b16 %v155
    %v176 = vunpack.c.l.b16 %v156
    %v177 = vpack.c.b16 %v174, %v173
    %v178 = vpack.c.b16 %v176, %v175
    %vm181 = vcmask 261120
    %v183 = vsel %vm181, %v168, 0
    %185 = vmatprep.subr.bf16.mxu0 0
    %186 = vmatpush1.bf16.msra.mxu0 0
    %187 = vmatprep.subr.bf16.mxu0 0
    %188 = vmatpush1.bf16.msra.mxu0 0
    %189 = vmatprep.subr.bf16.mxu0 0
    %190 = vmatpush1.bf16.msra.mxu0 0
    %191 = vmatprep.subr.bf16.mxu0 0
    %192 = vmatpush1.bf16.msra.mxu0 0
    %193 = vmatprep.subr.bf16.mxu0 0
    %194 = vmatpush1.bf16.msra.mxu0 0
    %195 = vmatprep.subr.bf16.mxu0 0
    %196 = vmatpush1.bf16.msra.mxu0 0
    %197 = vmatprep.subr.bf16.mxu0 0
    %198 = vmatpush1.bf16.msra.mxu0 %v178
    %199 = vmatprep.subr.bf16.mxu0 0
    %200 = vmatpush1.bf16.msra.mxu0 %v177
    %201 = vmatprep.subr.bf16.mxu0 0
    %202 = vmatpush2.bf16.msra.mxu0 0
    %203 = vmatprep.subr.bf16.mxu0 0
    %204 = vmatpush2.bf16.msra.mxu0 0
    %205 = vmatprep.subr.bf16.mxu0 0
    %206 = vmatpush2.bf16.msra.mxu0 0
    %207 = vmatprep.subr.bf16.mxu0 0
    %208 = vmatpush2.bf16.msra.mxu0 0
    %209 = vmatprep.subr.bf16.mxu0 0
    %210 = vmatpush2.bf16.msra.mxu0 0
    %211 = vmatprep.subr.bf16.mxu0 0
    %212 = vmatpush2.bf16.msra.mxu0 0
    %213 = vmatprep.subr.bf16.mxu0 0
    %214 = vmatpush2.bf16.msra.mxu0 0
    %215 = vmatprep.subr.bf16.mxu0 0
    %216 = vmatpush2.bf16.msra.mxu0 0
    %217 = vmatprep.mubr.bf16.mxu0 0
    %218 = vmatmul.mubr.bf16.gmra.mxu0 %v183
    %v219 = vpop.f32.mrf.mxu0
    %v220 = vadd.f32 %v162, %v219
    %v221 = vpop.f32.mrf.mxu0
    %v222 = vpop.f32.mrf.mxu0
    %v223 = vadd.f32 %v162, %v222
    %v224 = vpop.f32.mrf.mxu0
    %225 = vdwg.mxu0
    %v226 = vld [vmem:[#allocation3] sm:$0xff]
    %v227 = vld [vmem:[#allocation3 + $0x8] sm:$0xff]
    %228 = vmax.xlane.f32.xlu0 %v220
    %v229 = vpop.xlane.xlu0 %228
    %230 = vmax.xlane.f32.xlu0 %v223
    %v231 = vpop.xlane.xlu0 %230
    %v232 = vmax.f32 %v226, %v229
    %v233 = vmax.f32 %v227, %v231
    %v234 = vsub.f32 %v226, %v232
    %v235 = vsub.f32 %v227, %v233
    %v236 = vmul.f32 %v234, 1.442695
    %v237 = vpow.pop %v236
    %v238 = vmul.f32 %v235, 1.442695
    %v239 = vpow.pop %v238
    %v240 = vld [vmem:[#allocation4] sm:$0xff]
    %v241 = vld [vmem:[#allocation4 + $0x8] sm:$0xff]
    %v242 = vmul.f32 %v237, %v240
    %v243 = vmul.f32 %v239, %v241
    %245 = vset.pattern.permute.xlu0 0
    %246 = vperm.xlu0 %245, %v232
    %v247 = vpop.permute.xlu0 %246
    %250 = vset.pattern.permute.xlu0 0
    %251 = vperm.xlu0 %250, %v233
    %v252 = vpop.permute.xlu0 %251
    %v254 = vsub.f32 %v220, %v247
    %v255 = vsub.f32 %v223, %v252
    %v256 = vmul.f32 %v254, 1.442695
    %v257 = vpow.pop %v256
    %v258 = vmul.f32 %v255, 1.442695
    %v259 = vpow.pop %v258
    %260 = vadd.xlane.f32.xlu0 %v257
    %v261 = vpop.xlane.xlu0 %260
    %262 = vadd.xlane.f32.xlu0 %v259
    %v263 = vpop.xlane.xlu0 %262
    %v264 = vadd.f32 %v242, %v261
    %v265 = vadd.f32 %v243, %v263
    %vm266 = vcmask 7168
    %267 = vst.msk [vmem:[#allocation4] sm:$0xff] %vm266, %v264
    %268 = vst.msk [vmem:[#allocation4 + $0x8] sm:$0xff] %vm266, %v265
    %269 = vst.msk [vmem:[#allocation3] sm:$0xff] %vm266, %v232
    %270 = vst.msk [vmem:[#allocation3 + $0x8] sm:$0xff] %vm266, %v233
    %v271 = vlaneseq
    %v272 = vand.u32 %v271, 127
    %s273 = smul.u32 0, 128
    %v274 = vstv %s273
    %v275 = vadd.s32 %v272, %v274
    %v276 = vld [vmem:[%s1] sm:$0xff]
    %v277 = vld [vmem:[%s1 + $0x8] sm:$0xff]
    %278 = vset.pattern.permute.xlu0 0
    %279 = vperm.xlu0 %278, %v276
    %v280 = vpop.permute.xlu0 %279
    %281 = vset.pattern.permute.xlu0 0
    %282 = vperm.xlu0 %281, %v277
    %v283 = vpop.permute.xlu0 %282
    %vm284 = vcmp.eq.s32.totalorder %v275, %v280
    %vm285 = vcmp.eq.s32.totalorder %v275, %v283
    %v286 = vld [vmem:[#allocation5] sm:$0xff]
    %v287 = vld [vmem:[#allocation5 + $0x8] sm:$0xff]
    %v288 = vsel %vm284, %v220, 0.0
    %v289 = vsel %vm285, %v223, 0.0
    %290 = vadd.xlane.f32.xlu0 %v288
    %v291 = vpop.xlane.xlu0 %290
    %292 = vadd.xlane.f32.xlu0 %v289
    %v293 = vpop.xlane.xlu0 %292
    %v294 = vadd.f32 %v286, %v291
    %v295 = vadd.f32 %v287, %v293
    %296 = vst.msk [vmem:[#allocation5] sm:$0xff] %vm266, %v294
    %297 = vst.msk [vmem:[#allocation5 + $0x8] sm:$0xff] %vm266, %v295
    // Predicated region
    $region38: #{tpu_custom_call.1} parent=1 // pred_check
      %p298 = pneg %p52
    $region39: #{tpu_custom_call.1} parent=1 // pred_check_branch
      %300 = sbr.rel (%p298) target = $region41
    $region40: #{tpu_custom_call.1} parent=1 // pred_region
      %v301 = vld [vmem:[#allocation3] sm:$0xff]
      %v302 = vld [vmem:[#allocation3 + $0x8] sm:$0xff]
      %v303 = vld [vmem:[#allocation4] sm:$0xff]
      %v304 = vld [vmem:[#allocation4 + $0x8] sm:$0xff]
      %v305 = vlog2.pop %v303
      %v306 = vmul.f32 %v305, 0.6931472
      %v307 = vlog2.pop %v304
      %v308 = vmul.f32 %v307, 0.6931472
      %v309 = vadd.f32 %v301, %v306
      %v310 = vadd.f32 %v302, %v308
      %v311 = vld [vmem:[#allocation5] sm:$0xff]
      %v312 = vld [vmem:[#allocation5 + $0x8] sm:$0xff]
      %v313 = vsub.f32 %v309, %v311
      %v314 = vsub.f32 %v310, %v312
      %315 = vst.msk [vmem:[%s6] sm:$0xff] %vm266, %v313
      %316 = vst.msk [vmem:[%s6 + $0x8] sm:$0xff] %vm266, %v314
    $region41: #{tpu_custom_call.1} parent=1 // pred_fallthru
      _
    // Predicated region
    $region42: #{tpu_custom_call.1} parent=1 // pred_check
      _
    $region43: #{tpu_custom_call.1} parent=1 // pred_check_branch
      %318 = sbr.rel (0) target = $region45
    $region44: #{tpu_custom_call.1} parent=1 // pred_region
      _
    $region45: #{tpu_custom_call.1} parent=1 // pred_fallthru
      _
    // Predicated region
    $region46: #{tpu_custom_call.1} parent=1 // pred_check
      _
    $region47: #{tpu_custom_call.1} parent=1 // pred_check_branch
      %320 = sbr.rel (0) target = $region49
    $region48: #{tpu_custom_call.1} parent=1 // pred_region
      _
    $region49: #{tpu_custom_call.1} parent=1 // pred_fallthru
      _
    %321 = vsyncpa [#allocation7], 1
    %322 = vsyncpa [#allocation9], 1

</llo_original>
